<compile_context>
chip_gen: v7x
topology: tpu7x:2x2x1
jax: 0.10.0
libtpu: 0.0.40
codegen_flags: <defaults>
</compile_context>

<pallas_src>
import functools

import jax
import jax.numpy as jnp
from jax.experimental import pallas as pl
from jax.experimental.pallas import tpu as pltpu


def _round_up(n, m):
    return ((n + m - 1) // m) * m


def _vq_kernel(x_ref, wt_ref, w_ref, he2_ref, q_ref, idx_ref, sse_ref, *,
               n_valid):
    # x_ref  : (tm, D)  f32  tile of flattened inputs (tail rows may be OOB)
    # wt_ref : (D, Kp)  f32  transposed padded codebook (resident)
    # w_ref  : (Kp, D)  f32  padded codebook (resident)
    # he2_ref: (1, Kp)  f32  0.5*||e_k||^2, +huge for padded rows (resident)
    # q_ref  : (tm, D)  f32  quantized output tile
    # idx_ref: (tm, 1)  i32  argmin indices
    # sse_ref: (1, 1)   f32  this tile's partial sum of squared error
    x = x_ref[...]
    wt = wt_ref[...]
    tm = x.shape[0]
    kp = wt.shape[1]

    # Reduced score with the same argmin as the full squared distance:
    #   ||x-e||^2 = ||x||^2 + ||e||^2 - 2<x,e>   ~   0.5*||e||^2 - <x,e>
    xe = jnp.dot(x, wt, preferred_element_type=jnp.float32)       # (tm, Kp) MXU
    dist = he2_ref[...] - xe                                       # (tm, Kp)

    # argmin with first-occurrence tie-breaking (matches torch.argmin).
    min_d = jnp.min(dist, axis=1, keepdims=True)                   # (tm, 1)
    col = jax.lax.broadcasted_iota(jnp.int32, dist.shape, 1)       # (tm, Kp)
    idx = jnp.min(jnp.where(dist <= min_d, col, kp),
                  axis=1, keepdims=True)                           # (tm, 1)
    idx_ref[...] = idx

    # Gather codebook rows via one-hot matmul (MXU friendly, no dynamic gather).
    one_hot = (col == idx).astype(jnp.float32)                     # (tm, Kp)
    quant = jnp.dot(one_hot, w_ref[...],
                    preferred_element_type=jnp.float32)            # (tm, D)
    q_ref[...] = quant

    # Partial SSE.  The grid is cdiv(N, tm): the last tile may contain rows
    # past N holding undefined data; zero their contribution here (their q/idx
    # writes beyond row N are discarded by the output DMA masking).
    row0 = pl.program_id(0) * tm
    rid = row0 + jax.lax.broadcasted_iota(jnp.int32, (tm, 1), 0)   # (tm, 1)
    diff = jnp.where(rid < n_valid, quant - x, 0.0)                # (tm, D)
    sse_ref[...] = jnp.sum(diff * diff).reshape(1, 1)


@functools.partial(jax.jit, static_argnames=("commitment_cost", "tm"))
def vqvae_quantize(x, embedding_weight, commitment_cost=0.1, tm=2048):
    """Forward pass of VQVAEQuantizer.

    Args:
      x: float array of shape (..., D), D == embedding_dim.
      embedding_weight: float array of shape (K, D), the codebook.
      commitment_cost: commitment loss weight (static).
      tm: row tile size (static; sweep 1024-8192; 2048 is v7x-VMEM-safe).

    Returns:
      (quantized, loss, encoding_indices) matching the PyTorch forward values.
    """
    K, D = embedding_weight.shape
    w32 = embedding_weight.astype(jnp.float32)
    flat_x = x.reshape(-1, D).astype(jnp.float32)
    N = flat_x.shape[0]

    # Row tiling: no padding of x.  tm_eff is a multiple of 8 (BlockSpec
    # sublane constraint) and the grid covers N with cdiv; the kernel masks
    # the tail.  For large N prefer tm such that grid >= 2 so v7x megacore
    # sharding of the "parallel" axis has work on both TensorCores.
    tm_eff = min(_round_up(tm, 8), _round_up(N, 8))
    grid = (pl.cdiv(N, tm_eff),)

    # Codebook padded to a multiple of 128 rows: zero weights, huge half-norm
    # so padded entries can never be the argmin.  Transpose hoisted.
    k_pad = max(128, _round_up(K, 128))
    w_pad = jnp.zeros((k_pad, D), jnp.float32).at[:K].set(w32)
    wt_pad = w_pad.T  # (D, Kp)
    half_e2 = jnp.full((1, k_pad), 1e30, jnp.float32).at[0, :K].set(
        0.5 * jnp.sum(w32 * w32, axis=1))

    # VMEM budget for the chosen tile: double-buffered x/q/idx blocks, the
    # resident codebook blocks, and the (tm, Kp) f32 transients
    # (dist/col/one_hot + temporaries).  Headroom x2, capped for v7x (64 MiB).
    vmem_est = 4 * tm_eff * (2 * 2 * D      # x + q blocks, double buffered
                             + 2 * 128      # (tm,1) idx block lane-pads to 128
                             + 6 * k_pad)   # dist/col/one_hot + temps
    vmem_est += 4 * 2 * (2 * k_pad * D + 8 * k_pad)   # resident codebook/norms
    vmem_limit = int(min(100 * 2**20, max(32 * 2**20, 2 * vmem_est)))

    cost = pl.CostEstimate(
        flops=4 * N * k_pad * D,                        # two MXU matmuls
        transcendentals=0,
        bytes_accessed=4 * (2 * N * D + N + 2 * k_pad * D + k_pad),
    )

    kernel = functools.partial(_vq_kernel, n_valid=N)

    q, idx, sse = pl.pallas_call(
        kernel,
        out_shape=(
            jax.ShapeDtypeStruct((N, D), jnp.float32),
            jax.ShapeDtypeStruct((N, 1), jnp.int32),
            jax.ShapeDtypeStruct((grid[0], 1, 1), jnp.float32),
        ),
        grid_spec=pltpu.PrefetchScalarGridSpec(
            num_scalar_prefetch=0,
            grid=grid,
            in_specs=[
                pl.BlockSpec((tm_eff, D), lambda i: (i, 0)),   # flat_x tile
                pl.BlockSpec((D, k_pad), lambda i: (0, 0)),    # codebook^T (resident)
                pl.BlockSpec((k_pad, D), lambda i: (0, 0)),    # codebook (resident)
                pl.BlockSpec((1, k_pad), lambda i: (0, 0)),    # 0.5*||e||^2 (resident)
            ],
            out_specs=[
                pl.BlockSpec((tm_eff, D), lambda i: (i, 0)),   # quantized tile
                pl.BlockSpec((tm_eff, 1), lambda i: (i, 0)),   # indices tile
                pl.BlockSpec((None, 1, 1), lambda i: (i, 0, 0)),  # per-tile SSE
            ],
        ),
        compiler_params=pltpu.CompilerParams(
            # No cross-step accumulator -> safe to shard across cores (v7x).
            dimension_semantics=("parallel",),
            vmem_limit_bytes=vmem_limit,
        ),
        cost_estimate=cost,
    )(flat_x, wt_pad, w_pad, half_e2)

    mse = jnp.sum(sse) / jnp.float32(N * D)
    # q_latent_loss + commitment_cost * e_latent_loss; both equal mse in value.
    loss = (1.0 + commitment_cost) * mse
    quantized = q.reshape(x.shape)   # straight-through: same forward value
    return quantized, loss, idx


def _reference(x, w, commitment_cost):
    d = w.shape[1]
    flat_x = x.reshape(-1, d)
    dist = (jnp.sum(flat_x ** 2, axis=1, keepdims=True)
            + jnp.sum(w ** 2, axis=1)
            - 2.0 * flat_x @ w.T)
    idx = jnp.argmin(dist, axis=1)
    quant = w[idx].reshape(x.shape)
    mse = jnp.mean((quant - x) ** 2)
    loss = (1.0 + commitment_cost) * mse
    return quant, loss, idx


if __name__ == "__main__":
    num_embeddings = 64   # K
    embedding_dim = 32    # D
    commitment_cost = 0.1

    key = jax.random.PRNGKey(0)
    k_w, k_x1, k_x2 = jax.random.split(key, 3)

    # nn.Embedding weight initialized uniform(-1/K, 1/K), deterministic here.
    embedding_weight = jax.random.uniform(
        k_w, (num_embeddings, embedding_dim), dtype=jnp.float32,
        minval=-1.0 / num_embeddings, maxval=1.0 / num_embeddings)

    # Case 1: (batch=2, seq=8, D=32) -> 16 rows, default big tile, grid=1.
    x1 = jax.random.normal(k_x1, (2, 8, embedding_dim), dtype=jnp.float32) * 0.05
    # Case 2: (batch=3, seq=10, D=32) -> 30 rows with tm=8 -> grid=4 and a
    # partial final tile, exercising the in-kernel tail masking (no padding).
    x2 = jax.random.normal(k_x2, (3, 10, embedding_dim), dtype=jnp.float32) * 0.05

    for xin, tile in ((x1, 2048), (x2, 8)):
        quantized, loss, indices = vqvae_quantize(
            xin, embedding_weight, commitment_cost=commitment_cost, tm=tile)
        jax.block_until_ready((quantized, loss, indices))

        q_ref, loss_ref, idx_ref = _reference(xin, embedding_weight,
                                              commitment_cost)
        n_rows = xin.reshape(-1, embedding_dim).shape[0]
        assert quantized.shape == xin.shape
        assert indices.shape == (n_rows, 1)
        assert jnp.array_equal(indices[:, 0], idx_ref.astype(jnp.int32))
        assert jnp.allclose(quantized, q_ref, atol=1e-6)
        assert jnp.allclose(loss, loss_ref, rtol=1e-5, atol=1e-7)

    print("KERNEL_OK")
</pallas_src>

<mosaic_0001>
module attributes {stable_mosaic.version = 11 : i64} {
  func.func @_vq_kernel(%arg0: i32, %arg1: memref<16x32xf32, #tpu.memory_space<vmem>>, %arg2: memref<32x128xf32, #tpu.memory_space<vmem>>, %arg3: memref<128x32xf32, #tpu.memory_space<vmem>>, %arg4: memref<1x128xf32, #tpu.memory_space<vmem>>, %arg5: memref<16x32xf32, #tpu.memory_space<vmem>>, %arg6: memref<16x1xi32, #tpu.memory_space<vmem>>, %arg7: memref<1x1x1xf32, #tpu.memory_space<vmem>>) attributes {dimension_semantics = [#tpu.dimension_semantics<parallel>], iteration_bounds = array<i64: 1>, scalar_prefetch = 0 : i64, scratch_operands = 0 : i64, tpu.core_type = #tpu.core_type<tc>, window_params = [{transform_indices = @transform_0, window_bounds = array<i64: 16, 32>}, {pipeline_mode = #tpu.pipeline_mode<synchronous>, transform_indices = @transform_1, window_bounds = array<i64: 32, 128>}, {pipeline_mode = #tpu.pipeline_mode<synchronous>, transform_indices = @transform_2, window_bounds = array<i64: 128, 32>}, {pipeline_mode = #tpu.pipeline_mode<synchronous>, transform_indices = @transform_3, window_bounds = array<i64: 1, 128>}, {transform_indices = @transform_4, window_bounds = array<i64: 16, 32>}, {transform_indices = @transform_5, window_bounds = array<i64: 16, 1>}, {transform_indices = @transform_6, window_bounds = array<i64: 1, 1, 1>}]} {
    %c0 = arith.constant 0 : index
    %c0_0 = arith.constant 0 : index
    %0 = vector.load %arg1[%c0, %c0_0] : memref<16x32xf32, #tpu.memory_space<vmem>>, vector<16x32xf32>
    %c0_1 = arith.constant 0 : index
    %c0_2 = arith.constant 0 : index
    %1 = vector.load %arg2[%c0_1, %c0_2] : memref<32x128xf32, #tpu.memory_space<vmem>>, vector<32x128xf32>
    %cst = arith.constant dense<0.000000e+00> : vector<16x128xf32>
    %2 = tpu.matmul %0, %1, %cst {dimension_numbers = #tpu.dot_dimension_numbers<[1], [0], [0], [1], [0, 0, 1, 1], [], []>} : vector<16x32xf32>, vector<32x128xf32>, vector<16x128xf32> -> vector<16x128xf32>
    %c0_3 = arith.constant 0 : index
    %c0_4 = arith.constant 0 : index
    %3 = vector.load %arg4[%c0_3, %c0_4] : memref<1x128xf32, #tpu.memory_space<vmem>>, vector<1x128xf32>
    %4 = vector.broadcast %3 : vector<1x128xf32> to vector<16x128xf32>
    %5 = arith.subf %4, %2 : vector<16x128xf32>
    %cst_5 = arith.constant dense<0x7F800000> : vector<16xf32>
    %6 = vector.multi_reduction <minimumf>, %5, %cst_5 [1] : vector<16x128xf32> to vector<16xf32>
    %7 = vector.shape_cast %6 : vector<16xf32> to vector<16x1xf32>
    %8 = tpu.iota {dimensions = array<i32: 1>} : vector<16x128xi32>
    %9 = vector.broadcast %7 : vector<16x1xf32> to vector<16x128xf32>
    %10 = arith.cmpf ole, %5, %9 : vector<16x128xf32>
    %c128_i32 = arith.constant 128 : i32
    %11 = vector.broadcast %c128_i32 : i32 to vector<16x128xi32>
    %12 = arith.select %10, %8, %11 : vector<16x128xi1>, vector<16x128xi32>
    %cst_6 = arith.constant dense<2147483647> : vector<16xi32>
    %13 = vector.multi_reduction <minsi>, %12, %cst_6 [1] : vector<16x128xi32> to vector<16xi32>
    %14 = vector.shape_cast %13 : vector<16xi32> to vector<16x1xi32>
    %c0_7 = arith.constant 0 : index
    %c0_8 = arith.constant 0 : index
    %15 = vector.load %arg6[%c0_7, %c0_8] : memref<16x1xi32, #tpu.memory_space<vmem>>, vector<16x1xi32>
    tpu.vector_store %arg6[%c0_7, %c0_8], %14 {strides = array<i32>} : memref<16x1xi32, #tpu.memory_space<vmem>>, vector<16x1xi32>,
    %16 = vector.broadcast %14 : vector<16x1xi32> to vector<16x128xi32>
    %17 = arith.cmpi eq, %8, %16 : vector<16x128xi32>
    %18 = arith.extui %17 : vector<16x128xi1> to vector<16x128xi32>
    %19 = arith.sitofp %18 : vector<16x128xi32> to vector<16x128xf32>
    %c0_9 = arith.constant 0 : index
    %c0_10 = arith.constant 0 : index
    %20 = vector.load %arg3[%c0_9, %c0_10] : memref<128x32xf32, #tpu.memory_space<vmem>>, vector<128x32xf32>
    %cst_11 = arith.constant dense<0.000000e+00> : vector<16x32xf32>
    %21 = tpu.matmul %19, %20, %cst_11 {dimension_numbers = #tpu.dot_dimension_numbers<[1], [0], [0], [1], [0, 0, 1, 1], [], []>} : vector<16x128xf32>, vector<128x32xf32>, vector<16x32xf32> -> vector<16x32xf32>
    %c0_12 = arith.constant 0 : index
    %c0_13 = arith.constant 0 : index
    %22 = vector.load %arg5[%c0_12, %c0_13] : memref<16x32xf32, #tpu.memory_space<vmem>>, vector<16x32xf32>
    tpu.vector_store %arg5[%c0_12, %c0_13], %21 {strides = array<i32>} : memref<16x32xf32, #tpu.memory_space<vmem>>, vector<16x32xf32>,
    %c16_i32 = arith.constant 16 : i32
    %23 = arith.muli %arg0, %c16_i32 : i32
    %24 = tpu.iota {dimensions = array<i32: 0>} : vector<16x1xi32>
    %25 = vector.broadcast %23 : i32 to vector<16x1xi32>
    %26 = arith.addi %25, %24 : vector<16x1xi32>
    %c16_i32_14 = arith.constant 16 : i32
    %27 = vector.broadcast %c16_i32_14 : i32 to vector<16x1xi32>
    %28 = arith.cmpi slt, %26, %27 : vector<16x1xi32>
    %29 = arith.subf %21, %0 : vector<16x32xf32>
    %cst_15 = arith.constant 0.000000e+00 : f32
    %30 = vector.shape_cast %28 : vector<16x1xi1> to vector<16x1xi1>
    %31 = vector.broadcast %30 : vector<16x1xi1> to vector<16x32xi1>
    %32 = vector.broadcast %cst_15 : f32 to vector<16x32xf32>
    %33 = arith.select %31, %29, %32 : vector<16x32xi1>, vector<16x32xf32>
    %34 = arith.mulf %33, %33 : vector<16x32xf32>
    %35 = vector.shape_cast %34 : vector<16x32xf32> to vector<1x16x32xf32>
    %cst_16 = arith.constant dense<0.000000e+00> : vector<1xf32>
    %36 = vector.multi_reduction <add>, %35, %cst_16 [1, 2] : vector<1x16x32xf32> to vector<1xf32>
    %37 = vector.shape_cast %36 : vector<1xf32> to vector<1x1x1xf32>
    %38 = vector.extract %37[0, 0, 0] : f32 from vector<1x1x1xf32>
    %39 = vector.broadcast %38 : f32 to vector<1x1xf32>
    %c0_17 = arith.constant 0 : index
    %c0_18 = arith.constant 0 : index
    %c0_19 = arith.constant 0 : index
    %40 = vector.load %arg7[%c0_17, %c0_18, %c0_19] : memref<1x1x1xf32, #tpu.memory_space<vmem>>, vector<1x1x1xf32>
    %41 = vector.shape_cast %40 : vector<1x1x1xf32> to vector<1x1xf32>
    %42 = vector.shape_cast %39 : vector<1x1xf32> to vector<1x1x1xf32>
    tpu.vector_store %arg7[%c0_17, %c0_18, %c0_19], %42 {strides = array<i32>} : memref<1x1x1xf32, #tpu.memory_space<vmem>>, vector<1x1x1xf32>,
    return
  }
  func.func @transform_0(%arg0: i32) -> (i32, i32) {
    %c0_i32 = arith.constant 0 : i32
    %c0_i32_0 = arith.constant 0 : i32
    return %arg0, %c0_i32 : i32, i32
  }
  func.func @transform_1(%arg0: i32) -> (i32, i32) {
    %c0_i32 = arith.constant 0 : i32
    %c0_i32_0 = arith.constant 0 : i32
    %c0_i32_1 = arith.constant 0 : i32
    return %c0_i32, %c0_i32_0 : i32, i32
  }
  func.func @transform_2(%arg0: i32) -> (i32, i32) {
    %c0_i32 = arith.constant 0 : i32
    %c0_i32_0 = arith.constant 0 : i32
    %c0_i32_1 = arith.constant 0 : i32
    return %c0_i32, %c0_i32_0 : i32, i32
  }
  func.func @transform_3(%arg0: i32) -> (i32, i32) {
    %c0_i32 = arith.constant 0 : i32
    %c0_i32_0 = arith.constant 0 : i32
    %c0_i32_1 = arith.constant 0 : i32
    return %c0_i32, %c0_i32_0 : i32, i32
  }
  func.func @transform_4(%arg0: i32) -> (i32, i32) {
    %c0_i32 = arith.constant 0 : i32
    %c0_i32_0 = arith.constant 0 : i32
    return %arg0, %c0_i32 : i32, i32
  }
  func.func @transform_5(%arg0: i32) -> (i32, i32) {
    %c0_i32 = arith.constant 0 : i32
    %c0_i32_0 = arith.constant 0 : i32
    return %arg0, %c0_i32 : i32, i32
  }
  func.func @transform_6(%arg0: i32) -> (i32, i32, i32) {
    %c0_i32 = arith.constant 0 : i32
    %c0_i32_0 = arith.constant 0 : i32
    %c0_i32_1 = arith.constant 0 : i32
    return %arg0, %c0_i32, %c0_i32_0 : i32, i32, i32
  }
}

</mosaic_0001>

<llo_original>
// kernel: vqvae_quantize.1
$region0: #{vqvae_quantize.1}
  #allocation0 [shape = 'u32[]', space=smem, size = 0x4, offset = 0x4, fixed_abs, tag = 'smem constant byte address 0x4 - core index']
  #allocation1 [shape = 'u32[144,128]{1,0:T(1,128)}', space=vmem, size = 0x12000, scoped, tag = 'internal scratch']
  %s0 = inlined_call_operand.vmem [shape: f32[16,32], index: 0, kind: input, shape index: {}]
  %s1 = inlined_call_operand.vmem [shape: f32[32,128], index: 1, kind: input, shape index: {}]
  %s2 = inlined_call_operand.vmem [shape: f32[128,32], index: 2, kind: input, shape index: {}]
  %s3 = inlined_call_operand.vmem [shape: f32[1,128], index: 3, kind: input, shape index: {}]
  %s4 = inlined_call_operand.hbm [shape: f32[16,32], index: 4, kind: output, shape index: {0}]
  %s5 = inlined_call_operand.vmem [shape: s32[16,1], index: 5, kind: output, shape index: {1}]
  %s6 = inlined_call_operand.hbm [shape: f32[1,1,1], index: 6, kind: output, shape index: {2}]
  %7 = xla_tuple %s4, %s5, %s6
  %s8 = sld [smem:[#allocation0]]
  $region42: #{vqvae_quantize.1} parent=0
    _
  %s10 = ssub.s32 1, %s8
  %s11 = scalar_select 0, %s10, %s8
  $region1: #{vqvae_quantize.1} parent=0
    #allocation2 [shape = 'u8[8192]{0}', space=vmem, size = 0x2000, scoped, tag = 'output window, operand 0, single buffered']
    #allocation3 [shape = 's32[1]{0}', space=sflag, size = 0x4, scoped, tag = 'scoped memory for vqvae_quantize.1']
    #allocation4 [shape = 'u8[512]{0}', space=vmem, size = 0x400, scoped, tag = 'output window, operand 2, single buffered']
    #allocation5 [shape = 's32[1]{0}', space=sflag, size = 0x4, scoped, tag = 'scoped memory for vqvae_quantize.1']
    %12 = vsyncpa [#allocation3], 0
    %13 = vsyncpa [#allocation5], 0
    // Predicated region
    $region2: #{vqvae_quantize.1} parent=1 // pred_check
      _
    $region3: #{vqvae_quantize.1} parent=1 // pred_check_branch
      %15 = sbr.rel (0) target = $region5
    $region4: #{vqvae_quantize.1} parent=1 // pred_region
      _
    $region5: #{vqvae_quantize.1} parent=1 // pred_fallthru
      _
    // Predicated region
    $region6: #{vqvae_quantize.1} parent=1 // pred_check
      _
    $region7: #{vqvae_quantize.1} parent=1 // pred_check_branch
      %17 = sbr.rel (0) target = $region9
    $region8: #{vqvae_quantize.1} parent=1 // pred_region
      _
    $region9: #{vqvae_quantize.1} parent=1 // pred_fallthru
      _
    // Predicated region
    $region10: #{vqvae_quantize.1} parent=1 // pred_check
      _
    $region11: #{vqvae_quantize.1} parent=1 // pred_check_branch
      %19 = sbr.rel (0) target = $region13
    $region12: #{vqvae_quantize.1} parent=1 // pred_region
      _
    $region13: #{vqvae_quantize.1} parent=1 // pred_fallthru
      _
    // Predicated region
    $region14: #{vqvae_quantize.1} parent=1 // pred_check
      _
    $region15: #{vqvae_quantize.1} parent=1 // pred_check_branch
      %21 = sbr.rel (0) target = $region17
    $region16: #{vqvae_quantize.1} parent=1 // pred_region
      _
    $region17: #{vqvae_quantize.1} parent=1 // pred_fallthru
      _
    %v22 = vld [vmem:[%s0] sm:$0xff]
    %v23 = vld [vmem:[%s0 + $0x8] sm:$0xff]
    %v24 = vld [vmem:[%s1] sm:$0xff]
    %v25 = vld [vmem:[%s1 + $0x8] sm:$0xff]
    %v26 = vld [vmem:[%s1 + $0x10] sm:$0xff]
    %v27 = vld [vmem:[%s1 + $0x18] sm:$0xff]
    %vm28 = vcmask 261120
    %v30 = vsel %vm28, %v22, 0
    %v33 = vsel %vm28, %v23, 0
    %35 = vmatprep.subr.mxu0 0.0
    %36 = vmatpush1.msra.mxu0 %v24
    %37 = vmatprep.subr.mxu0 0.0
    %38 = vmatpush1.msra.mxu0 %v25
    %39 = vmatprep.subr.mxu0 0.0
    %40 = vmatpush1.msra.mxu0 %v26
    %41 = vmatprep.subr.mxu0 0.0
    %42 = vmatpush1.msra.mxu0 %v27
    %43 = vmatprep.subr.mxu0 0.0
    %44 = vmatpush1.msra.mxu0 0.0
    %45 = vmatprep.subr.mxu0 0.0
    %46 = vmatpush1.msra.mxu0 0.0
    %47 = vmatprep.subr.mxu0 0.0
    %48 = vmatpush1.msra.mxu0 0.0
    %49 = vmatprep.subr.mxu0 0.0
    %50 = vmatpush1.msra.mxu0 0.0
    %51 = vmatprep.subr.mxu0 0.0
    %52 = vmatpush1.msra.mxu0 0.0
    %53 = vmatprep.subr.mxu0 0.0
    %54 = vmatpush1.msra.mxu0 0.0
    %55 = vmatprep.subr.mxu0 0.0
    %56 = vmatpush1.msra.mxu0 0.0
    %57 = vmatprep.subr.mxu0 0.0
    %58 = vmatpush1.msra.mxu0 0.0
    %59 = vmatprep.subr.mxu0 0.0
    %60 = vmatpush1.msra.mxu0 0.0
    %61 = vmatprep.subr.mxu0 0.0
    %62 = vmatpush1.msra.mxu0 0.0
    %63 = vmatprep.subr.mxu0 0.0
    %64 = vmatpush1.msra.mxu0 0.0
    %65 = vmatprep.subr.mxu0 0.0
    %66 = vmatpush1.msra.mxu0 0.0
    %67 = vmatprep.subr.mxu0 0.0
    %68 = vmatpush1.msra.mxu0 0.0
    %69 = vmatprep.subr.mxu0 0.0
    %70 = vmatpush1.msra.mxu0 0.0
    %71 = vmatprep.subr.mxu0 0.0
    %72 = vmatpush1.msra.mxu0 0.0
    %73 = vmatprep.subr.mxu0 0.0
    %74 = vmatpush1.msra.mxu0 0.0
    %75 = vmatprep.subr.mxu0 0.0
    %76 = vmatpush1.msra.mxu0 0.0
    %77 = vmatprep.subr.mxu0 0.0
    %78 = vmatpush1.msra.mxu0 0.0
    %79 = vmatprep.subr.mxu0 0.0
    %80 = vmatpush1.msra.mxu0 0.0
    %81 = vmatprep.subr.mxu0 0.0
    %82 = vmatpush1.msra.mxu0 0.0
    %83 = vmatprep.subr.mxu0 0.0
    %84 = vmatpush1.msra.mxu0 0.0
    %85 = vmatprep.subr.mxu0 0.0
    %86 = vmatpush1.msra.mxu0 0.0
    %87 = vmatprep.subr.mxu0 0.0
    %88 = vmatpush1.msra.mxu0 0.0
    %89 = vmatprep.subr.mxu0 0.0
    %90 = vmatpush1.msra.mxu0 0.0
    %91 = vmatprep.subr.mxu0 0.0
    %92 = vmatpush1.msra.mxu0 0.0
    %93 = vmatprep.subr.mxu0 0.0
    %94 = vmatpush1.msra.mxu0 0.0
    %95 = vmatprep.subr.mxu0 0.0
    %96 = vmatpush1.msra.mxu0 0.0
    %97 = vmatprep.subr.mxu0 0.0
    %98 = vmatpush1.msra.mxu0 0.0
    %99 = vmatprep.mubr.f32.mxu0 0.0
    %100 = vmatmul.mubr.f32.gmra.mrb[0].mxu0 %v30
    %v101 = vpop.f32.mrb[0].mxu0
    %v102 = vadd.f32 0.0, %v101
    %v103 = vpop.f32.mrb[0].mxu0
    %104 = vmatprep.mubr.f32.mxu0 0.0
    %105 = vmatmul.mubr.f32.gmra.mrb[0].mxu0 %v33
    %v106 = vpop.f32.mrb[0].mxu0
    %v107 = vadd.f32 0.0, %v106
    %v108 = vpop.f32.mrb[0].mxu0
    %109 = vdwg.mxu0
    %v110 = vld [vmem:[%s3] sm:$0x1]
    %v112 = vlaneseq
    %v113 = vshrl.u32 %v112, 7
    %v114 = vsub.s32 0, %v113
    %v115 = vrot.slane %v110, %v114
    %v117 = vsub.f32 %v115, %v102
    %v118 = vsub.f32 %v115, %v107
    %119 = vmin.xlane.f32.xlu0 %v117
    %v120 = vpop.xlane.xlu0 %119
    %121 = vmin.xlane.f32.xlu0 %v118
    %v122 = vpop.xlane.xlu0 %121
    %v123 = vlaneseq
    %v124 = vand.u32 %v123, 127
    %vm125 = vcmp.le.f32.partialorder %v117, %v120
    %vm126 = vcmp.le.f32.partialorder %v118, %v122
    %v127 = vsel %vm125, %v124, 128
    %v128 = vsel %vm126, %v124, 128
    %v129 = vand.u32 %v127, 65535
    %v130 = vshra.s32 %v127, 16
    %v131 = vcvt.s32.f32 %v129
    %v132 = vcvt.s32.f32 %v130
    %133 = vmin.xlane.f32.xlu0 %v132
    %v134 = vpop.xlane.xlu0 %133
    %vm135 = vcmp.eq.f32.partialorder %v132, %v134
    %v136 = vsel %vm135, %v131, inf
    %137 = vmin.xlane.f32.xlu0 %v136
    %v138 = vpop.xlane.xlu0 %137
    %v139 = vcvt.f32.s32 %v138
    %v140 = vcvt.f32.s32 %v134
    %v141 = vshll.u32 %v140, 16
    %v142 = vadd.s32 %v141, %v139
    %v143 = vand.u32 %v128, 65535
    %v144 = vshra.s32 %v128, 16
    %v145 = vcvt.s32.f32 %v143
    %v146 = vcvt.s32.f32 %v144
    %147 = vmin.xlane.f32.xlu0 %v146
    %v148 = vpop.xlane.xlu0 %147
    %vm149 = vcmp.eq.f32.partialorder %v146, %v148
    %v150 = vsel %vm149, %v145, inf
    %151 = vmin.xlane.f32.xlu0 %v150
    %v152 = vpop.xlane.xlu0 %151
    %v153 = vcvt.f32.s32 %v152
    %v154 = vcvt.f32.s32 %v148
    %v155 = vshll.u32 %v154, 16
    %v156 = vadd.s32 %v155, %v153
    %vm157 = vcmask 7168
    %158 = vst.msk [vmem:[%s5] sm:$0xff] %vm157, %v142
    %159 = vst.msk [vmem:[%s5 + $0x8] sm:$0xff] %vm157, %v156
    %vm160 = vcmp.eq.s32.totalorder %v124, %v142
    %vm161 = vcmp.eq.s32.totalorder %v124, %v156
    %v162 = vsel %vm160, 1, 0
    %v163 = vsel %vm161, 1, 0
    %v164 = vcvt.s32.f32 %v162
    %v165 = vcvt.s32.f32 %v163
    %v166 = vld [vmem:[%s2] sm:$0xff]
    %v167 = vld [vmem:[%s2 + $0x8] sm:$0xff]
    %v168 = vld [vmem:[%s2 + $0x10] sm:$0xff]
    %v169 = vld [vmem:[%s2 + $0x18] sm:$0xff]
    %v170 = vld [vmem:[%s2 + $0x20] sm:$0xff]
    %v171 = vld [vmem:[%s2 + $0x28] sm:$0xff]
    %v172 = vld [vmem:[%s2 + $0x30] sm:$0xff]
    %v173 = vld [vmem:[%s2 + $0x38] sm:$0xff]
    %v174 = vld [vmem:[%s2 + $0x40] sm:$0xff]
    %v175 = vld [vmem:[%s2 + $0x48] sm:$0xff]
    %v176 = vld [vmem:[%s2 + $0x50] sm:$0xff]
    %v177 = vld [vmem:[%s2 + $0x58] sm:$0xff]
    %v178 = vld [vmem:[%s2 + $0x60] sm:$0xff]
    %v179 = vld [vmem:[%s2 + $0x68] sm:$0xff]
    %v180 = vld [vmem:[%s2 + $0x70] sm:$0xff]
    %v181 = vld [vmem:[%s2 + $0x78] sm:$0xff]
    %182 = vmatprep.subr.mxu0 0.0
    %183 = vmatpush1.msra.mxu0 %v166
    %184 = vmatprep.subr.mxu0 0.0
    %185 = vmatpush1.msra.mxu0 %v167
    %186 = vmatprep.subr.mxu0 0.0
    %187 = vmatpush1.msra.mxu0 %v168
    %188 = vmatprep.subr.mxu0 0.0
    %189 = vmatpush1.msra.mxu0 %v169
    %190 = vmatprep.subr.mxu0 0.0
    %191 = vmatpush1.msra.mxu0 %v170
    %192 = vmatprep.subr.mxu0 0.0
    %193 = vmatpush1.msra.mxu0 %v171
    %194 = vmatprep.subr.mxu0 0.0
    %195 = vmatpush1.msra.mxu0 %v172
    %196 = vmatprep.subr.mxu0 0.0
    %197 = vmatpush1.msra.mxu0 %v173
    %198 = vmatprep.subr.mxu0 0.0
    %199 = vmatpush1.msra.mxu0 %v174
    %200 = vmatprep.subr.mxu0 0.0
    %201 = vmatpush1.msra.mxu0 %v175
    %202 = vmatprep.subr.mxu0 0.0
    %203 = vmatpush1.msra.mxu0 %v176
    %204 = vmatprep.subr.mxu0 0.0
    %205 = vmatpush1.msra.mxu0 %v177
    %206 = vmatprep.subr.mxu0 0.0
    %207 = vmatpush1.msra.mxu0 %v178
    %208 = vmatprep.subr.mxu0 0.0
    %209 = vmatpush1.msra.mxu0 %v179
    %210 = vmatprep.subr.mxu0 0.0
    %211 = vmatpush1.msra.mxu0 %v180
    %212 = vmatprep.subr.mxu0 0.0
    %213 = vmatpush1.msra.mxu0 %v181
    %214 = vmatprep.subr.mxu0 0.0
    %215 = vmatpush1.msra.mxu0 0.0
    %216 = vmatprep.subr.mxu0 0.0
    %217 = vmatpush1.msra.mxu0 0.0
    %218 = vmatprep.subr.mxu0 0.0
    %219 = vmatpush1.msra.mxu0 0.0
    %220 = vmatprep.subr.mxu0 0.0
    %221 = vmatpush1.msra.mxu0 0.0
    %222 = vmatprep.subr.mxu0 0.0
    %223 = vmatpush1.msra.mxu0 0.0
    %224 = vmatprep.subr.mxu0 0.0
    %225 = vmatpush1.msra.mxu0 0.0
    %226 = vmatprep.subr.mxu0 0.0
    %227 = vmatpush1.msra.mxu0 0.0
    %228 = vmatprep.subr.mxu0 0.0
    %229 = vmatpush1.msra.mxu0 0.0
    %230 = vmatprep.subr.mxu0 0.0
    %231 = vmatpush1.msra.mxu0 0.0
    %232 = vmatprep.subr.mxu0 0.0
    %233 = vmatpush1.msra.mxu0 0.0
    %234 = vmatprep.subr.mxu0 0.0
    %235 = vmatpush1.msra.mxu0 0.0
    %236 = vmatprep.subr.mxu0 0.0
    %237 = vmatpush1.msra.mxu0 0.0
    %238 = vmatprep.subr.mxu0 0.0
    %239 = vmatpush1.msra.mxu0 0.0
    %240 = vmatprep.subr.mxu0 0.0
    %241 = vmatpush1.msra.mxu0 0.0
    %242 = vmatprep.subr.mxu0 0.0
    %243 = vmatpush1.msra.mxu0 0.0
    %244 = vmatprep.subr.mxu0 0.0
    %245 = vmatpush1.msra.mxu0 0.0
    %246 = vmatprep.mubr.f32.mxu0 0.0
    %247 = vmatmul.mubr.f32.gmra.mrb[0].mxu0 %v164
    %v248 = vpop.f32.mrb[0].mxu0
    %v249 = vadd.f32 0.0, %v248
    %v250 = vpop.f32.mrb[0].mxu0
    %251 = vmatprep.mubr.f32.mxu0 0.0
    %252 = vmatmul.mubr.f32.gmra.mrb[0].mxu0 %v165
    %v253 = vpop.f32.mrb[0].mxu0
    %v254 = vadd.f32 0.0, %v253
    %v255 = vpop.f32.mrb[0].mxu0
    %256 = vdwg.mxu0
    %257 = vst.msk [vmem:[#allocation2] sm:$0xff] %vm28, %v249
    %258 = vst.msk [vmem:[#allocation2 + $0x8] sm:$0xff] %vm28, %v254
    %s259 = smul.u32 0, 16
    %v260 = vlaneseq
    %v261 = vshrl.u32 %v260, 7
    %v262 = vadd.s32 %v261, 8
    %v263 = vstv %s259
    %v264 = vadd.s32 %v263, %v261
    %v265 = vadd.s32 %v263, %v262
    %vm266 = vcmp.lt.s32.totalorder %v264, 16
    %vm267 = vcmp.lt.s32.totalorder %v265, 16
    %v268 = vsub.f32 %v249, %v22
    %v269 = vsub.f32 %v254, %v23
    %v270 = vsel %vm266, 1, 0
    %v271 = vsel %vm267, 1, 0
    %vm272 = vcmp.eq.s32.totalorder %v270, 1
    %vm273 = vcmp.eq.s32.totalorder %v271, 1
    %v274 = vsel %vm272, %v268, 0.0
    %v275 = vsel %vm273, %v269, 0.0
    %v276 = vmul.f32 %v274, %v274
    %v277 = vmul.f32 %v275, %v275
    %v278 = vsel %vm28, %v276, 0.0
    %v279 = vsel %vm28, %v277, 0.0
    %v280 = vadd.f32 %v278, %v279
    %281 = vadd.xlane.f32.xlu0 %v280
    %v282 = vpop.xlane.xlu0 %281
    %v283 = vrot.slane %v282, 4
    %v284 = vadd.f32 %v282, %v283
    %v285 = vrot.slane %v284, 2
    %v286 = vadd.f32 %v284, %v285
    %v287 = vrot.slane %v286, 1
    %v288 = vadd.f32 %v286, %v287
    %s289 = vtos %v288
    %v290 = vstv %s289
    %vm291 = vcmask 0
    %292 = vst.msk [vmem:[#allocation4] sm:$0x1] %vm291, %v290
    // Predicated region
    $region18: #{vqvae_quantize.1} parent=1 // pred_check
      _
    $region19: #{vqvae_quantize.1} parent=1 // pred_check_branch
      %294 = sbr.rel (0) target = $region21
    $region20: #{vqvae_quantize.1} parent=1 // pred_region
      %s296 = ssub.s32 256, 256
      %297 = vsyncadd [#allocation3], %s296
      %s298 = sshll.u32 [#allocation2], 4
      %s299 = int_to_ptr.vmem [resolvable:$true] %s298
      %304 = dma.vmem_to_hbm [thread:$0]  %s299, 256, %s4, [#allocation3], 128, 128, 8
    $region21: #{vqvae_quantize.1} parent=1 // pred_fallthru
      _
    // Predicated region
    $region22: #{vqvae_quantize.1} parent=1 // pred_check
      _
    $region23: #{vqvae_quantize.1} parent=1 // pred_check_branch
      %306 = sbr.rel (0) target = $region25
    $region24: #{vqvae_quantize.1} parent=1 // pred_region
      _
    $region25: #{vqvae_quantize.1} parent=1 // pred_fallthru
      _
    // Predicated region
    $region26: #{vqvae_quantize.1} parent=1 // pred_check
      _
    $region27: #{vqvae_quantize.1} parent=1 // pred_check_branch
      %308 = sbr.rel (0) target = $region29
    $region28: #{vqvae_quantize.1} parent=1 // pred_region
      %s310 = ssub.s32 16, 16
      %311 = vsyncadd [#allocation5], %s310
      %s313 = sshll.u32 [#allocation4], 4
      %s314 = int_to_ptr.vmem [resolvable:$true] %s313
      %316 = dma.vmem_to_hbm [thread:$0]  %s314, 16, %s6, [#allocation5]
    $region29: #{vqvae_quantize.1} parent=1 // pred_fallthru
      _
    // Predicated region
    $region30: #{vqvae_quantize.1} parent=1 // pred_check
      _
    $region31: #{vqvae_quantize.1} parent=1 // pred_check_branch
      %318 = sbr.rel (0) target = $region33
    $region32: #{vqvae_quantize.1} parent=1 // pred_region
      %319 = dma.done [#allocation3], 256
    $region33: #{vqvae_quantize.1} parent=1 // pred_fallthru
      _
    // Predicated region
    $region34: #{vqvae_quantize.1} parent=1 // pred_check
      _
    $region35: #{vqvae_quantize.1} parent=1 // pred_check_branch
      %321 = sbr.rel (0) target = $region37
    $region36: #{vqvae_quantize.1} parent=1 // pred_region
      _
    $region37: #{vqvae_quantize.1} parent=1 // pred_fallthru
      _
    // Predicated region
    $region38: #{vqvae_quantize.1} parent=1 // pred_check
      _
    $region39: #{vqvae_quantize.1} parent=1 // pred_check_branch
      %323 = sbr.rel (0) target = $region41
    $region40: #{vqvae_quantize.1} parent=1 // pred_region
      %324 = dma.done [#allocation5], 16
    $region41: #{vqvae_quantize.1} parent=1 // pred_fallthru
      _
    %325 = vsyncpa [#allocation3], 1
    %326 = vsyncpa [#allocation5], 1

</llo_original>
